<compile_context>
chip_gen: v5e
topology: v5e:2x2
jax: 0.10.0
libtpu: 0.0.40
codegen_flags: <defaults>
</compile_context>

<pallas_src>
import jax
import jax.numpy as jnp
from jax.experimental import pallas as pl
from jax.experimental.pallas import tpu as pltpu


_SMALL_BYTES = 256 * 1024  # below this per array, XLA's fused elementwise wins


def _transformer_kernel(x_ref, u_ref, v_ref, o_ref):
    # x*U + (1-x)*V == V + x*(U - V)   (3 VPU ops; ~1 ulp from reference form)
    x = x_ref[...]
    u = u_ref[...]
    v = v_ref[...]
    o_ref[...] = (v + x * (u - v)).astype(o_ref.dtype)


def _vmem_budget():
    """Per-buffer tile byte budget and scoped-VMEM limit, generation aware."""
    vmem_cap = None
    try:
        info = pltpu.get_tpu_info()
        vmem_cap = getattr(info, "vmem_capacity_bytes", None)
    except Exception:
        vmem_cap = None
    if vmem_cap is not None and vmem_cap > 64 * 1024 * 1024:
        # v5e / v6e: 128 MiB VMEM -> bigger blocks amortize per-step overhead.
        return 6 * 1024 * 1024, 64 * 1024 * 1024
    # v7x (64 MiB/core) or unknown: stay conservative.
    # 4 streams x 2 buffers x 4 MiB = 32 MiB, limit 40 MiB leaves headroom.
    return 4 * 1024 * 1024, 40 * 1024 * 1024


def _choose_tile_rows(rows, lane, itemsize, sub, max_tile_bytes):
    """Row tile: multiple of `sub`, capped by the byte budget, >=2 grid steps."""
    if rows <= sub:
        return rows  # single full-extent block (legal even if not 8-aligned)
    budget_rows = max(sub, ((max_tile_bytes // (lane * itemsize)) // sub) * sub)
    cap = (rows // sub) * sub  # largest sub-multiple not exceeding rows
    tile_m = max(sub, min(budget_rows, cap))
    # v7x megacore: make sure the "parallel" row axis has >= 2 grid steps so
    # both TensorCores get work; harmless on single-TC chips.
    if rows >= 2 * sub and pl.cdiv(rows, tile_m) < 2:
        tile_m = max(sub, ((tile_m // 2) // sub) * sub)
    return tile_m


def transformer_forward(x, U, V, *, force_pallas=False):
    """Pallas TPU forward of Transformer: x * U + (1 - x) * V (elementwise)."""
    assert x.shape == U.shape == V.shape, "x, U, V must share a shape"
    orig_shape = x.shape
    dtype = x.dtype
    total = x.size
    itemsize = jnp.dtype(dtype).itemsize

    # Small-size fallback: pallas_call fixed cost dominates; XLA fuses this.
    if total == 0 or (not force_pallas and total * itemsize <= _SMALL_BYTES):
        return x * U + (1 - x) * V

    max_tile_bytes, vmem_limit = _vmem_budget()
    sub = max(8, 32 // max(itemsize, 1))  # sublane packing multiple

    # ---- choose a zero-copy 2-D (rows, lane) view (metadata-only reshapes) --
    if (x.ndim >= 2
            and orig_shape[-1] % 128 == 0
            and orig_shape[-1] * sub * itemsize <= max_tile_bytes):
        # Fast path: natural (collapsed-leading, hidden) layout, unmasked stores.
        lane = orig_shape[-1]
        rows = total // lane
    elif total % 128 == 0:
        # Flatten path: lane-dense view via free bitcast-reshape.
        lane = 128
        for cand in (2048, 1024, 512, 256):
            if total % cand == 0 and total // cand >= sub:
                lane = cand
                break
        rows = total // lane
    else:
        # Ragged path: full last-dim blocks (masked partial stores; correctness
        # path -- PINNs hidden sizes are multiples of 128 in practice).
        lane = orig_shape[-1] if x.ndim >= 2 else total
        rows = total // lane

    x2 = x.reshape(rows, lane)
    u2 = U.reshape(rows, lane)
    v2 = V.reshape(rows, lane)

    tile_m = _choose_tile_rows(rows, lane, itemsize, sub, max_tile_bytes)
    grid = (pl.cdiv(rows, tile_m),)  # uneven grid: Pallas drops OOB writes
    spec = pl.BlockSpec((tile_m, lane), lambda i: (i, 0))

    out2 = pl.pallas_call(
        _transformer_kernel,
        out_shape=jax.ShapeDtypeStruct((rows, lane), dtype),
        grid=grid,
        in_specs=[spec, spec, spec],
        out_specs=spec,
        compiler_params=pltpu.CompilerParams(
            dimension_semantics=("parallel",),
            vmem_limit_bytes=vmem_limit,
        ),
    )(x2, u2, v2)

    return out2.reshape(orig_shape)


if __name__ == "__main__":
    key = jax.random.PRNGKey(0)
    kx, ku, kv = jax.random.split(key, 3)

    def ref_fn(x, U, V):
        return x * U + (1.0 - x) * V

    # 1) Fast path (last dim % 128 == 0), forced through the Pallas kernel.
    x = jax.random.uniform(kx, (128, 256), dtype=jnp.float32)
    U = jax.random.normal(ku, (128, 256), dtype=jnp.float32)
    V = jax.random.normal(kv, (128, 256), dtype=jnp.float32)
    out = jax.block_until_ready(transformer_forward(x, U, V, force_pallas=True))
    assert out.shape == x.shape and out.dtype == x.dtype
    assert jnp.max(jnp.abs(out - ref_fn(x, U, V))) < 1e-5

    # 2) Ragged shape (full-dim boundary blocks), forced through Pallas.
    x2 = jax.random.uniform(kx, (7, 100), dtype=jnp.float32)
    U2 = jax.random.normal(ku, (7, 100), dtype=jnp.float32)
    V2 = jax.random.normal(kv, (7, 100), dtype=jnp.float32)
    out2 = jax.block_until_ready(transformer_forward(x2, U2, V2, force_pallas=True))
    assert jnp.max(jnp.abs(out2 - ref_fn(x2, U2, V2))) < 1e-5

    # 3) 3-D shape, total % 128 == 0 but last dim not -> flatten path with an
    #    uneven row grid (exercises Pallas boundary masking, no padding).
    x3 = jax.random.uniform(kx, (2, 12, 64), dtype=jnp.float32)
    U3 = jax.random.normal(ku, (2, 12, 64), dtype=jnp.float32)
    V3 = jax.random.normal(kv, (2, 12, 64), dtype=jnp.float32)
    out3 = jax.block_until_ready(transformer_forward(x3, U3, V3, force_pallas=True))
    assert jnp.max(jnp.abs(out3 - ref_fn(x3, U3, V3))) < 1e-5

    # 4) Default small-input path (jnp fallback).
    x4 = jax.random.uniform(kx, (16, 256), dtype=jnp.float32)
    U4 = jax.random.normal(ku, (16, 256), dtype=jnp.float32)
    V4 = jax.random.normal(kv, (16, 256), dtype=jnp.float32)
    out4 = jax.block_until_ready(transformer_forward(x4, U4, V4))
    assert jnp.max(jnp.abs(out4 - ref_fn(x4, U4, V4))) < 1e-5

    print("KERNEL_OK")
</pallas_src>

<mosaic_0001>
module attributes {stable_mosaic.version = 11 : i64} {
  func.func @_transformer_kernel(%arg0: i32, %arg1: memref<64x256xf32, #tpu.memory_space<vmem>>, %arg2: memref<64x256xf32, #tpu.memory_space<vmem>>, %arg3: memref<64x256xf32, #tpu.memory_space<vmem>>, %arg4: memref<64x256xf32, #tpu.memory_space<vmem>>) attributes {dimension_semantics = [#tpu.dimension_semantics<parallel>], iteration_bounds = array<i64: 2>, scalar_prefetch = 0 : i64, scratch_operands = 0 : i64, tpu.core_type = #tpu.core_type<tc>, window_params = [{transform_indices = @transform_0, window_bounds = array<i64: 64, 256>}, {transform_indices = @transform_1, window_bounds = array<i64: 64, 256>}, {transform_indices = @transform_2, window_bounds = array<i64: 64, 256>}, {transform_indices = @transform_3, window_bounds = array<i64: 64, 256>}]} {
    %c0 = arith.constant 0 : index
    %c0_0 = arith.constant 0 : index
    %0 = vector.load %arg1[%c0, %c0_0] : memref<64x256xf32, #tpu.memory_space<vmem>>, vector<64x256xf32>
    %c0_1 = arith.constant 0 : index
    %c0_2 = arith.constant 0 : index
    %1 = vector.load %arg2[%c0_1, %c0_2] : memref<64x256xf32, #tpu.memory_space<vmem>>, vector<64x256xf32>
    %c0_3 = arith.constant 0 : index
    %c0_4 = arith.constant 0 : index
    %2 = vector.load %arg3[%c0_3, %c0_4] : memref<64x256xf32, #tpu.memory_space<vmem>>, vector<64x256xf32>
    %3 = arith.subf %1, %2 : vector<64x256xf32>
    %4 = arith.mulf %0, %3 : vector<64x256xf32>
    %5 = arith.addf %2, %4 : vector<64x256xf32>
    %c0_5 = arith.constant 0 : index
    %c0_6 = arith.constant 0 : index
    %6 = vector.load %arg4[%c0_5, %c0_6] : memref<64x256xf32, #tpu.memory_space<vmem>>, vector<64x256xf32>
    tpu.vector_store %arg4[%c0_5, %c0_6], %5 {strides = array<i32>} : memref<64x256xf32, #tpu.memory_space<vmem>>, vector<64x256xf32>,
    return
  }
  func.func @transform_0(%arg0: i32) -> (i32, i32) {
    %c0_i32 = arith.constant 0 : i32
    %c0_i32_0 = arith.constant 0 : i32
    return %arg0, %c0_i32 : i32, i32
  }
  func.func @transform_1(%arg0: i32) -> (i32, i32) {
    %c0_i32 = arith.constant 0 : i32
    %c0_i32_0 = arith.constant 0 : i32
    return %arg0, %c0_i32 : i32, i32
  }
  func.func @transform_2(%arg0: i32) -> (i32, i32) {
    %c0_i32 = arith.constant 0 : i32
    %c0_i32_0 = arith.constant 0 : i32
    return %arg0, %c0_i32 : i32, i32
  }
  func.func @transform_3(%arg0: i32) -> (i32, i32) {
    %c0_i32 = arith.constant 0 : i32
    %c0_i32_0 = arith.constant 0 : i32
    return %arg0, %c0_i32 : i32, i32
  }
}

</mosaic_0001>

<llo_original>
// kernel: tpu_custom_call.1
$region0: #{tpu_custom_call.1}
  #allocation0 [shape = 'u32[]', space=smem, size = 0x4, offset = 0x4, fixed_abs, tag = 'smem constant byte address 0x4 - core index']
  #allocation1 [shape = 'u32[72,128]{1,0:T(1,128)}', space=vmem, size = 0x9000, scoped, tag = 'internal scratch']
  %s0 = inlined_call_operand.hbm [shape: f32[128,256], index: 0, kind: input, shape index: {}]
  %s1 = inlined_call_operand.hbm [shape: f32[128,256], index: 1, kind: input, shape index: {}]
  %s2 = inlined_call_operand.hbm [shape: f32[128,256], index: 2, kind: input, shape index: {}]
  %s3 = inlined_call_operand.hbm [shape: f32[128,256], index: 3, kind: output, shape index: {}]
  %s4 = sld [smem:[#allocation0]]
  $region57: #{tpu_custom_call.1} parent=0
    _
  %s6 = ssub.s32 1, %s4
  %s7 = scalar_select 0, %s6, %s4
  $region1: #{tpu_custom_call.1} parent=0
    #allocation2 [shape = 'u8[131072]{0}', space=vmem, size = 0x20000, scoped, tag = 'input window, operand 0']
    #allocation3 [shape = 's32[2]{0}', space=sflag, size = 0x8, scoped, tag = 'scoped memory for tpu_custom_call.1']
    #allocation4 [shape = 's32[2]{0}', space=sflag, size = 0x8, scoped, tag = 'scoped memory for tpu_custom_call.1']
    #allocation5 [shape = 'u8[131072]{0}', space=vmem, size = 0x20000, scoped, tag = 'input window, operand 1']
    #allocation6 [shape = 's32[2]{0}', space=sflag, size = 0x8, scoped, tag = 'scoped memory for tpu_custom_call.1']
    #allocation7 [shape = 'u8[131072]{0}', space=vmem, size = 0x20000, scoped, tag = 'input window, operand 2']
    #allocation8 [shape = 'u8[131072]{0}', space=vmem, size = 0x20000, scoped, tag = 'output window, operand 0']
    %8 = vsyncpa [#allocation3], 0
    %s9 = scalar_lea.sflag [#allocation3], 1
    %10 = vsyncpa %s9, 0
    %11 = vsyncpa [#allocation6], 0
    %s12 = scalar_lea.sflag [#allocation6], 1
    %13 = vsyncpa %s12, 0
    %14 = vsyncpa [#allocation4], 0
    %s15 = scalar_lea.sflag [#allocation4], 1
    %16 = vsyncpa %s15, 0
    loop: start=0, step=1, limit=4
    $region2: #{tpu_custom_call.1} parent=1 // loop_pre_header
      _
    $region3: #{tpu_custom_call.1} parent=1 // loop_header
      %s18 = sphi 0, %s22
      %p19 = scmp.ge.s32.totalorder %s18, 4
      %s28 = sphi 0, %s30
      %s31 = sphi 0, %s28
      %s32 = sphi 0, %s31
      %s48 = sphi 0, %s32
      %s54 = sphi 0, %s56
      %s57 = sphi 0, %s54
      %s58 = sphi 0, %s57
      %s74 = sphi 0, %s58
      %s80 = sphi 0, %s82
      %s83 = sphi 0, %s80
      %s84 = sphi 0, %s83
      %s100 = sphi 0, %s84
      %s106 = sphi 0, %s108
      %s109 = sphi 0, %s106
      %s110 = sphi 0, %s109
      %s126 = sphi 0, %s110
    $region4: #{tpu_custom_call.1} parent=1 // loop_header_branch
      %21 = sbr.rel (%p19) target = $region8
    $region5: #{tpu_custom_call.1} parent=1 // loop_body
      %s23 = ssub.s32 %s18, 1
      %s24 = ssub.s32 %s18, 2
      %s25 = sadd.s32 %s18, 1
      %s26 = ssub.s32 %s18, %s25
      %p27 = scmp.eq.s32.totalorder %s26, 0
      %s29 = sadd.s32 %s28, 1
      %s30 = scalar_select %p27, %s28, %s29
      %p33 = pneg %p27
      %p34 = scmp.eq.s32.totalorder %s18, 1
      %p35 = por %p33, %p34
      %p36 = scmp.ne.s32.totalorder %s28, %s31
      %p37 = scmp.eq.s32.totalorder %s18, 0
      %p38 = por %p36, %p37
      %p39 = scmp.ne.s32.totalorder %s28, %s31
      %p40 = scmp.eq.s32.totalorder %s23, 1
      %p41 = por %p39, %p40
      %p42 = scmp.ne.s32.totalorder %s31, %s32
      %p43 = scmp.eq.s32.totalorder %s23, 0
      %p44 = por %p42, %p43
      %p45 = scmp.ne.s32.totalorder %s31, %s32
      %p46 = scmp.eq.s32.totalorder %s24, 1
      %p47 = por %p45, %p46
      %p49 = scmp.ne.s32.totalorder %s32, %s48
      %p50 = scmp.eq.s32.totalorder %s24, 0
      %p51 = por %p49, %p50
      %s52 = ssub.s32 %s18, %s25
      %p53 = scmp.eq.s32.totalorder %s52, 0
      %s55 = sadd.s32 %s54, 1
      %s56 = scalar_select %p53, %s54, %s55
      %p59 = pneg %p53
      %p60 = scmp.eq.s32.totalorder %s18, 1
      %p61 = por %p59, %p60
      %p62 = scmp.ne.s32.totalorder %s54, %s57
      %p63 = scmp.eq.s32.totalorder %s18, 0
      %p64 = por %p62, %p63
      %p65 = scmp.ne.s32.totalorder %s54, %s57
      %p66 = scmp.eq.s32.totalorder %s23, 1
      %p67 = por %p65, %p66
      %p68 = scmp.ne.s32.totalorder %s57, %s58
      %p69 = scmp.eq.s32.totalorder %s23, 0
      %p70 = por %p68, %p69
      %p71 = scmp.ne.s32.totalorder %s57, %s58
      %p72 = scmp.eq.s32.totalorder %s24, 1
      %p73 = por %p71, %p72
      %p75 = scmp.ne.s32.totalorder %s58, %s74
      %p76 = scmp.eq.s32.totalorder %s24, 0
      %p77 = por %p75, %p76
      %s78 = ssub.s32 %s18, %s25
      %p79 = scmp.eq.s32.totalorder %s78, 0
      %s81 = sadd.s32 %s80, 1
      %s82 = scalar_select %p79, %s80, %s81
      %p85 = pneg %p79
      %p86 = scmp.eq.s32.totalorder %s18, 1
      %p87 = por %p85, %p86
      %p88 = scmp.ne.s32.totalorder %s80, %s83
      %p89 = scmp.eq.s32.totalorder %s18, 0
      %p90 = por %p88, %p89
      %p91 = scmp.ne.s32.totalorder %s80, %s83
      %p92 = scmp.eq.s32.totalorder %s23, 1
      %p93 = por %p91, %p92
      %p94 = scmp.ne.s32.totalorder %s83, %s84
      %p95 = scmp.eq.s32.totalorder %s23, 0
      %p96 = por %p94, %p95
      %p97 = scmp.ne.s32.totalorder %s83, %s84
      %p98 = scmp.eq.s32.totalorder %s24, 1
      %p99 = por %p97, %p98
      %p101 = scmp.ne.s32.totalorder %s84, %s100
      %p102 = scmp.eq.s32.totalorder %s24, 0
      %p103 = por %p101, %p102
      %s104 = ssub.s32 %s18, %s25
      %p105 = scmp.eq.s32.totalorder %s104, 0
      %s107 = sadd.s32 %s106, 1
      %s108 = scalar_select %p105, %s106, %s107
      %p111 = pneg %p105
      %p112 = scmp.eq.s32.totalorder %s18, 1
      %p113 = por %p111, %p112
      %p114 = scmp.ne.s32.totalorder %s106, %s109
      %p115 = scmp.eq.s32.totalorder %s18, 0
      %p116 = por %p114, %p115
      %p117 = scmp.ne.s32.totalorder %s106, %s109
      %p118 = scmp.eq.s32.totalorder %s23, 1
      %p119 = por %p117, %p118
      %p120 = scmp.ne.s32.totalorder %s109, %s110
      %p121 = scmp.eq.s32.totalorder %s23, 0
      %p122 = por %p120, %p121
      %p123 = scmp.ne.s32.totalorder %s109, %s110
      %p124 = scmp.eq.s32.totalorder %s24, 1
      %p125 = por %p123, %p124
      %p127 = scmp.ne.s32.totalorder %s110, %s126
      %p128 = scmp.eq.s32.totalorder %s24, 0
      %p129 = por %p127, %p128
      %p130 = scmp.le.s32.totalorder 1, %s18
      %p131 = scmp.lt.s32.totalorder %s18, 3
      %p132 = pnand %p130, %p131
      %p133 = pneg %p132
      // Predicated region
      $region9: #{tpu_custom_call.1} parent=5 // pred_check
        _
      $region10: #{tpu_custom_call.1} parent=5 // pred_check_branch
        %135 = sbr.rel (%p132) target = $region12
      $region11: #{tpu_custom_call.1} parent=5 // pred_region
        %s136 = ssub.s32 %s18, 1
      $region12: #{tpu_custom_call.1} parent=5 // pred_fallthru
        _
      %p137 = scmp.lt.s32.totalorder %s18, 2
      // Predicated region
      $region13: #{tpu_custom_call.1} parent=5 // pred_check
        %p138 = pneg %p137
      $region14: #{tpu_custom_call.1} parent=5 // pred_check_branch
        %140 = sbr.rel (%p138) target = $region16
      $region15: #{tpu_custom_call.1} parent=5 // pred_region
        // Predicated region
        $region17: #{tpu_custom_call.1} parent=15 // pred_check
          %p141 = pneg %p38
        $region18: #{tpu_custom_call.1} parent=15 // pred_check_branch
          %143 = sbr.rel (%p141) target = $region20
        $region19: #{tpu_custom_call.1} parent=15 // pred_region
          %s144 = sand.u32 %s28, 1
          %s145 = scalar_lea.sflag [#allocation3], %s144
          %s146 = sand.u32 %s28, 1
          %s147 = smul.addr %s146, 128
          %s148 = scalar_lea.vmem [#allocation2], %s147
          %s149 = smul.u32 8, %s18
          %151 = vsyncadd %s145, 0
          %s152 = smul.addr %s149, 2
          %s153 = smul.addr %s152, 8
          %s154 = scalar_lea.hbm %s0, %s153
          %s155 = sshll.u32 %s154, 4
          %s156 = int_to_ptr.hbm [resolvable:$true] %s155
          %s157 = sshll.u32 %s148, 4
          %s158 = int_to_ptr.vmem [resolvable:$true] %s157
          %163 = dma.hbm_to_vmem [thread:$0]  %s156, 2048, %s158, %s145, 256, 256, 16
        $region20: #{tpu_custom_call.1} parent=15 // pred_fallthru
          _
        // Predicated region
        $region21: #{tpu_custom_call.1} parent=15 // pred_check
          %p164 = pneg %p64
        $region22: #{tpu_custom_call.1} parent=15 // pred_check_branch
          %166 = sbr.rel (%p164) target = $region24
        $region23: #{tpu_custom_call.1} parent=15 // pred_region
          %s167 = sand.u32 %s18, 1
          %s168 = scalar_lea.sflag [#allocation6], %s167
          %s169 = sand.u32 %s54, 1
          %s170 = smul.addr %s169, 128
          %s171 = scalar_lea.vmem [#allocation5], %s170
          %s172 = smul.u32 8, %s18
          %174 = vsyncadd %s168, 0
          %s175 = smul.addr %s172, 2
          %s176 = smul.addr %s175, 8
          %s177 = scalar_lea.hbm %s1, %s176
          %s178 = sshll.u32 %s177, 4
          %s179 = int_to_ptr.hbm [resolvable:$true] %s178
          %s180 = sshll.u32 %s171, 4
          %s181 = int_to_ptr.vmem [resolvable:$true] %s180
          %186 = dma.hbm_to_vmem [thread:$0]  %s179, 2048, %s181, %s168, 256, 256, 16
        $region24: #{tpu_custom_call.1} parent=15 // pred_fallthru
          _
        // Predicated region
        $region25: #{tpu_custom_call.1} parent=15 // pred_check
          %p187 = pneg %p90
        $region26: #{tpu_custom_call.1} parent=15 // pred_check_branch
          %189 = sbr.rel (%p187) target = $region28
        $region27: #{tpu_custom_call.1} parent=15 // pred_region
          %s190 = sand.u32 %s18, 1
          %s191 = scalar_lea.sflag [#allocation6], %s190
          %s192 = sand.u32 %s80, 1
          %s193 = smul.addr %s192, 128
          %s194 = scalar_lea.vmem [#allocation7], %s193
          %s195 = smul.u32 8, %s18
          %197 = vsyncadd %s191, 0
          %s198 = smul.addr %s195, 2
          %s199 = smul.addr %s198, 8
          %s200 = scalar_lea.hbm %s2, %s199
          %s201 = sshll.u32 %s200, 4
          %s202 = int_to_ptr.hbm [resolvable:$true] %s201
          %s203 = sshll.u32 %s194, 4
          %s204 = int_to_ptr.vmem [resolvable:$true] %s203
          %209 = dma.hbm_to_vmem [thread:$0]  %s202, 2048, %s204, %s191, 256, 256, 16
        $region28: #{tpu_custom_call.1} parent=15 // pred_fallthru
          _
      $region16: #{tpu_custom_call.1} parent=5 // pred_fallthru
        _
      %p210 = scmp.le.s32.totalorder 1, %s18
      %p211 = scmp.lt.s32.totalorder %s18, 3
      %p212 = pnand %p210, %p211
      %p213 = pneg %p212
      // Predicated region
      $region29: #{tpu_custom_call.1} parent=5 // pred_check
        _
      $region30: #{tpu_custom_call.1} parent=5 // pred_check_branch
        %215 = sbr.rel (%p212) target = $region32
      $region31: #{tpu_custom_call.1} parent=5 // pred_region
        %s216 = ssub.s32 %s18, 1
        %s217 = sand.u32 %s31, 1
        %s218 = scalar_lea.sflag [#allocation3], %s217
        %s219 = sand.u32 %s31, 1
        %s220 = smul.addr %s219, 128
        %s221 = scalar_lea.vmem [#allocation2], %s220
        // Predicated region
        $region33: #{tpu_custom_call.1} parent=31 // pred_check
          %p222 = pneg %p44
        $region34: #{tpu_custom_call.1} parent=31 // pred_check_branch
          %224 = sbr.rel (%p222) target = $region36
        $region35: #{tpu_custom_call.1} parent=31 // pred_region
          %226 = dma.done %s218, 2048
        $region36: #{tpu_custom_call.1} parent=31 // pred_fallthru
          _
        %s227 = sand.u32 %s23, 1
        %s228 = scalar_lea.sflag [#allocation6], %s227
        %s229 = sand.u32 %s57, 1
        %s230 = smul.addr %s229, 128
        %s231 = scalar_lea.vmem [#allocation5], %s230
        // Predicated region
        $region37: #{tpu_custom_call.1} parent=31 // pred_check
          %p232 = pneg %p70
        $region38: #{tpu_custom_call.1} parent=31 // pred_check_branch
          %234 = sbr.rel (%p232) target = $region40
        $region39: #{tpu_custom_call.1} parent=31 // pred_region
          %236 = dma.done %s228, 2048
        $region40: #{tpu_custom_call.1} parent=31 // pred_fallthru
          _
        %s237 = sand.u32 %s23, 1
        %s238 = scalar_lea.sflag [#allocation6], %s237
        %s239 = sand.u32 %s83, 1
        %s240 = smul.addr %s239, 128
        %s241 = scalar_lea.vmem [#allocation7], %s240
        // Predicated region
        $region41: #{tpu_custom_call.1} parent=31 // pred_check
          %p242 = pneg %p96
        $region42: #{tpu_custom_call.1} parent=31 // pred_check_branch
          %244 = sbr.rel (%p242) target = $region44
        $region43: #{tpu_custom_call.1} parent=31 // pred_region
          %246 = dma.done %s238, 2048
        $region44: #{tpu_custom_call.1} parent=31 // pred_fallthru
          _
        %s247 = sand.u32 %s31, 1
        %s248 = scalar_lea.sflag [#allocation3], %s247
        %s249 = sand.u32 %s31, 1
        %s250 = smul.addr %s249, 128
        %s251 = scalar_lea.vmem [#allocation2], %s250
        %p252 = pneg %p44
        %p253 = pneg %p41
        %s254 = sand.u32 %s23, 1
        %s255 = scalar_lea.sflag [#allocation6], %s254
        %s256 = sand.u32 %s57, 1
        %s257 = smul.addr %s256, 128
        %s258 = scalar_lea.vmem [#allocation5], %s257
        %p259 = pneg %p70
        %p260 = pneg %p67
        %s261 = sand.u32 %s23, 1
        %s262 = scalar_lea.sflag [#allocation6], %s261
        %s263 = sand.u32 %s83, 1
        %s264 = smul.addr %s263, 128
        %s265 = scalar_lea.vmem [#allocation7], %s264
        %p266 = pneg %p96
        %p267 = pneg %p93
        %p268 = pneg %p122
        %p269 = pneg %p119
        %s270 = sand.u32 %s109, 1
        %s271 = scalar_lea.sflag [#allocation4], %s270
        %s272 = sand.u32 %s109, 1
        %s273 = smul.addr %s272, 128
        %s274 = scalar_lea.vmem [#allocation8], %s273
        %s275 = smul.u32 8, %s23
        %s276 = smul.u32 8, %s23
        %s277 = smul.u32 8, %s23
        %s278 = smul.u32 8, %s23
        %v279 = vld [vmem:[%s221] sm:$0xff]
        %v280 = vld [vmem:[%s221 + $0x8] sm:$0xff]
        %v281 = vld [vmem:[%s221 + $0x10] sm:$0xff]
        %v282 = vld [vmem:[%s221 + $0x18] sm:$0xff]
        %v283 = vld [vmem:[%s221 + $0x20] sm:$0xff]
        %v284 = vld [vmem:[%s221 + $0x28] sm:$0xff]
        %v285 = vld [vmem:[%s221 + $0x30] sm:$0xff]
        %v286 = vld [vmem:[%s221 + $0x38] sm:$0xff]
        %v287 = vld [vmem:[%s221 + $0x40] sm:$0xff]
        %v288 = vld [vmem:[%s221 + $0x48] sm:$0xff]
        %v289 = vld [vmem:[%s221 + $0x50] sm:$0xff]
        %v290 = vld [vmem:[%s221 + $0x58] sm:$0xff]
        %v291 = vld [vmem:[%s221 + $0x60] sm:$0xff]
        %v292 = vld [vmem:[%s221 + $0x68] sm:$0xff]
        %v293 = vld [vmem:[%s221 + $0x70] sm:$0xff]
        %v294 = vld [vmem:[%s221 + $0x78] sm:$0xff]
        %v295 = vld [vmem:[%s231] sm:$0xff]
        %v296 = vld [vmem:[%s231 + $0x8] sm:$0xff]
        %v297 = vld [vmem:[%s231 + $0x10] sm:$0xff]
        %v298 = vld [vmem:[%s231 + $0x18] sm:$0xff]
        %v299 = vld [vmem:[%s231 + $0x20] sm:$0xff]
        %v300 = vld [vmem:[%s231 + $0x28] sm:$0xff]
        %v301 = vld [vmem:[%s231 + $0x30] sm:$0xff]
        %v302 = vld [vmem:[%s231 + $0x38] sm:$0xff]
        %v303 = vld [vmem:[%s231 + $0x40] sm:$0xff]
        %v304 = vld [vmem:[%s231 + $0x48] sm:$0xff]
        %v305 = vld [vmem:[%s231 + $0x50] sm:$0xff]
        %v306 = vld [vmem:[%s231 + $0x58] sm:$0xff]
        %v307 = vld [vmem:[%s231 + $0x60] sm:$0xff]
        %v308 = vld [vmem:[%s231 + $0x68] sm:$0xff]
        %v309 = vld [vmem:[%s231 + $0x70] sm:$0xff]
        %v310 = vld [vmem:[%s231 + $0x78] sm:$0xff]
        %v311 = vld [vmem:[%s241] sm:$0xff]
        %v312 = vld [vmem:[%s241 + $0x8] sm:$0xff]
        %v313 = vld [vmem:[%s241 + $0x10] sm:$0xff]
        %v314 = vld [vmem:[%s241 + $0x18] sm:$0xff]
        %v315 = vld [vmem:[%s241 + $0x20] sm:$0xff]
        %v316 = vld [vmem:[%s241 + $0x28] sm:$0xff]
        %v317 = vld [vmem:[%s241 + $0x30] sm:$0xff]
        %v318 = vld [vmem:[%s241 + $0x38] sm:$0xff]
        %v319 = vld [vmem:[%s241 + $0x40] sm:$0xff]
        %v320 = vld [vmem:[%s241 + $0x48] sm:$0xff]
        %v321 = vld [vmem:[%s241 + $0x50] sm:$0xff]
        %v322 = vld [vmem:[%s241 + $0x58] sm:$0xff]
        %v323 = vld [vmem:[%s241 + $0x60] sm:$0xff]
        %v324 = vld [vmem:[%s241 + $0x68] sm:$0xff]
        %v325 = vld [vmem:[%s241 + $0x70] sm:$0xff]
        %v326 = vld [vmem:[%s241 + $0x78] sm:$0xff]
        %v327 = vsub.f32 %v295, %v311
        %v328 = vsub.f32 %v296, %v312
        %v329 = vsub.f32 %v297, %v313
        %v330 = vsub.f32 %v298, %v314
        %v331 = vsub.f32 %v299, %v315
        %v332 = vsub.f32 %v300, %v316
        %v333 = vsub.f32 %v301, %v317
        %v334 = vsub.f32 %v302, %v318
        %v335 = vsub.f32 %v303, %v319
        %v336 = vsub.f32 %v304, %v320
        %v337 = vsub.f32 %v305, %v321
        %v338 = vsub.f32 %v306, %v322
        %v339 = vsub.f32 %v307, %v323
        %v340 = vsub.f32 %v308, %v324
        %v341 = vsub.f32 %v309, %v325
        %v342 = vsub.f32 %v310, %v326
        %v343 = vmul.f32 %v279, %v327
        %v344 = vmul.f32 %v280, %v328
        %v345 = vmul.f32 %v281, %v329
        %v346 = vmul.f32 %v282, %v330
        %v347 = vmul.f32 %v283, %v331
        %v348 = vmul.f32 %v284, %v332
        %v349 = vmul.f32 %v285, %v333
        %v350 = vmul.f32 %v286, %v334
        %v351 = vmul.f32 %v287, %v335
        %v352 = vmul.f32 %v288, %v336
        %v353 = vmul.f32 %v289, %v337
        %v354 = vmul.f32 %v290, %v338
        %v355 = vmul.f32 %v291, %v339
        %v356 = vmul.f32 %v292, %v340
        %v357 = vmul.f32 %v293, %v341
        %v358 = vmul.f32 %v294, %v342
        %v359 = vadd.f32 %v311, %v343
        %v360 = vadd.f32 %v312, %v344
        %v361 = vadd.f32 %v313, %v345
        %v362 = vadd.f32 %v314, %v346
        %v363 = vadd.f32 %v315, %v347
        %v364 = vadd.f32 %v316, %v348
        %v365 = vadd.f32 %v317, %v349
        %v366 = vadd.f32 %v318, %v350
        %v367 = vadd.f32 %v319, %v351
        %v368 = vadd.f32 %v320, %v352
        %v369 = vadd.f32 %v321, %v353
        %v370 = vadd.f32 %v322, %v354
        %v371 = vadd.f32 %v323, %v355
        %v372 = vadd.f32 %v324, %v356
        %v373 = vadd.f32 %v325, %v357
        %v374 = vadd.f32 %v326, %v358
        %375 = vst [vmem:[%s274] sm:$0xff] %v359
        %376 = vst [vmem:[%s274 + $0x8] sm:$0xff] %v360
        %377 = vst [vmem:[%s274 + $0x10] sm:$0xff] %v361
        %378 = vst [vmem:[%s274 + $0x18] sm:$0xff] %v362
        %379 = vst [vmem:[%s274 + $0x20] sm:$0xff] %v363
        %380 = vst [vmem:[%s274 + $0x28] sm:$0xff] %v364
        %381 = vst [vmem:[%s274 + $0x30] sm:$0xff] %v365
        %382 = vst [vmem:[%s274 + $0x38] sm:$0xff] %v366
        %383 = vst [vmem:[%s274 + $0x40] sm:$0xff] %v367
        %384 = vst [vmem:[%s274 + $0x48] sm:$0xff] %v368
        %385 = vst [vmem:[%s274 + $0x50] sm:$0xff] %v369
        %386 = vst [vmem:[%s274 + $0x58] sm:$0xff] %v370
        %387 = vst [vmem:[%s274 + $0x60] sm:$0xff] %v371
        %388 = vst [vmem:[%s274 + $0x68] sm:$0xff] %v372
        %389 = vst [vmem:[%s274 + $0x70] sm:$0xff] %v373
        %390 = vst [vmem:[%s274 + $0x78] sm:$0xff] %v374
        %s391 = sand.u32 %s109, 1
        %s392 = scalar_lea.sflag [#allocation4], %s391
        %s393 = sand.u32 %s109, 1
        %s394 = smul.addr %s393, 128
        %s395 = scalar_lea.vmem [#allocation8], %s394
        // Predicated region
        $region45: #{tpu_custom_call.1} parent=31 // pred_check
          %p396 = pneg %p119
        $region46: #{tpu_custom_call.1} parent=31 // pred_check_branch
          %398 = sbr.rel (%p396) target = $region48
        $region47: #{tpu_custom_call.1} parent=31 // pred_region
          %s399 = smul.u32 8, %s23
          %401 = vsyncadd %s392, 0
          %s402 = smul.addr %s399, 2
          %s403 = smul.addr %s402, 8
          %s404 = scalar_lea.hbm %s3, %s403
          %s405 = sshll.u32 %s395, 4
          %s406 = int_to_ptr.vmem [resolvable:$true] %s405
          %s407 = sshll.u32 %s404, 4
          %s408 = int_to_ptr.hbm [resolvable:$true] %s407
          %413 = dma.vmem_to_hbm [thread:$0]  %s406, 2048, %s408, %s392, 256, 256, 16
        $region48: #{tpu_custom_call.1} parent=31 // pred_fallthru
          _
      $region32: #{tpu_custom_call.1} parent=5 // pred_fallthru
        _
      %p414 = scmp.le.s32.totalorder 2, %s18
      // Predicated region
      $region49: #{tpu_custom_call.1} parent=5 // pred_check
        %p415 = pneg %p414
      $region50: #{tpu_custom_call.1} parent=5 // pred_check_branch
        %417 = sbr.rel (%p415) target = $region52
      $region51: #{tpu_custom_call.1} parent=5 // pred_region
        %s418 = ssub.s32 %s18, 2
        // Predicated region
        $region53: #{tpu_custom_call.1} parent=51 // pred_check
          %p419 = pneg %p125
        $region54: #{tpu_custom_call.1} parent=51 // pred_check_branch
          %421 = sbr.rel (%p419) target = $region56
        $region55: #{tpu_custom_call.1} parent=51 // pred_region
          %s422 = sand.u32 %s110, 1
          %s423 = scalar_lea.sflag [#allocation4], %s422
          %s424 = sand.u32 %s110, 1
          %s425 = smul.addr %s424, 128
          %s426 = scalar_lea.vmem [#allocation8], %s425
          %428 = dma.done %s423, 2048
        $region56: #{tpu_custom_call.1} parent=51 // pred_fallthru
          _
      $region52: #{tpu_custom_call.1} parent=5 // pred_fallthru
        _
    $region6: #{tpu_custom_call.1} parent=1 // loop_footer
      %s22 = sadd.s32 1, %s18
    $region7: #{tpu_custom_call.1} parent=1 // loop_footer_branch
      %17 = sbr.rel target = $region3
    $region8: #{tpu_custom_call.1} parent=1 // loop_exit
      _
    %429 = vsyncpa [#allocation3], 1
    %s430 = scalar_lea.sflag [#allocation3], 1
    %431 = vsyncpa %s430, 1
    %432 = vsyncpa [#allocation6], 1
    %s433 = scalar_lea.sflag [#allocation6], 1
    %434 = vsyncpa %s433, 1
    %435 = vsyncpa [#allocation4], 1
    %s436 = scalar_lea.sflag [#allocation4], 1
    %437 = vsyncpa %s436, 1

</llo_original>
